<compile_context>
chip_gen: v7x
topology: tpu7x:2x2x1
jax: 0.10.0
libtpu: 0.0.40
codegen_flags: <defaults>
</compile_context>

<pallas_src>
import jax
import jax.numpy as jnp
from jax.experimental import pallas as pl
from jax.experimental.pallas import tpu as pltpu

_LANE_BLOCK = 384  # lcm(3, 128): lane-dense chunk that keeps [x, y, theta] aligned


def _se2_loss_kernel(pred_ref, targ_ref, w_ref, o_ref, acc_ref):
    """Process one (T, 384) tile of the flattened pose streams.

    pred_ref, targ_ref : (T, 384) tiles in VMEM, native dtype (cast here)
    w_ref              : (1, 384) f32, [1/B, 1/B, rg/B] repeated 128x
    o_ref              : (1, 1) f32 output in SMEM (final scalar loss)
    acc_ref            : (1, 1) f32 SMEM scratch accumulator
    """
    @pl.when(pl.program_id(0) == 0)
    def _init():
        acc_ref[0, 0] = jnp.float32(0.0)

    d = pred_ref[...].astype(jnp.float32) - targ_ref[...].astype(jnp.float32)
    acc_ref[0, 0] += jnp.sum(d * d * w_ref[...])

    @pl.when(pl.program_id(0) == pl.num_programs(0) - 1)
    def _finalize():
        o_ref[0, 0] = acc_ref[0, 0]


def se2_pose_loss(pose_pred, pose_target, block_width, block_length, row_tile=None):
    """Pallas implementation of SE2PoseLoss.forward."""
    assert pose_pred.shape == pose_target.shape
    assert pose_pred.ndim == 2 and pose_pred.shape[-1] == 3
    B = pose_pred.shape[0]

    rg = float(((block_length ** 2 + block_width ** 2) / 12.0) ** 0.5)
    inv_b = 1.0 / float(B)
    # Per-lane weights with 1/B folded in; pattern period 3 divides 384 so it
    # stays aligned with the flattened [x, y, theta, x, y, theta, ...] stream.
    w_row = jnp.tile(jnp.array([inv_b, inv_b, rg * inv_b], jnp.float32),
                     _LANE_BLOCK // 3).reshape(1, _LANE_BLOCK)

    flat_len = B * 3
    rows_needed = pl.cdiv(flat_len, _LANE_BLOCK)
    if row_tile is None:
        # Big tiles amortize per-grid-step overhead but stay well under the
        # scoped-VMEM default on all generations (incl. v7x's 32 MiB).
        row_tile = 512 if rows_needed >= 512 else rows_needed
    row_tile = max(8, ((row_tile + 7) // 8) * 8)          # (8, 128) sublane rule
    padded_rows = ((rows_needed + row_tile - 1) // row_tile) * row_tile
    padded_len = padded_rows * _LANE_BLOCK
    grid = (padded_rows // row_tile,)

    def _prep(x):
        x = x.reshape(-1)                                  # native dtype, no cast
        if padded_len != flat_len:
            x = jnp.pad(x, (0, padded_len - flat_len))     # zero diff in the tail
        return x.reshape(padded_rows, _LANE_BLOCK)

    pred2d = _prep(pose_pred)
    targ2d = _prep(pose_target)

    out = pl.pallas_call(
        _se2_loss_kernel,
        out_shape=jax.ShapeDtypeStruct((1, 1), jnp.float32),
        grid_spec=pltpu.PrefetchScalarGridSpec(
            num_scalar_prefetch=0,
            grid=grid,
            in_specs=[
                pl.BlockSpec((row_tile, _LANE_BLOCK), lambda i: (i, 0)),
                pl.BlockSpec((row_tile, _LANE_BLOCK), lambda i: (i, 0)),
                pl.BlockSpec((1, _LANE_BLOCK), lambda i: (0, 0)),
            ],
            out_specs=pl.BlockSpec((1, 1), lambda i: (0, 0),
                                   memory_space=pltpu.MemorySpace.SMEM),
            scratch_shapes=[pltpu.SMEM((1, 1), jnp.float32)],
        ),
        compiler_params=pltpu.CompilerParams(
            dimension_semantics=("arbitrary",)),
    )(pred2d, targ2d, w_row)
    return out[0, 0]


def _reference(pose_pred, pose_target, block_width, block_length):
    rg = ((block_length ** 2 + block_width ** 2) / 12.0) ** 0.5
    d = pose_pred.astype(jnp.float32) - pose_target.astype(jnp.float32)
    return (jnp.mean(d[:, 0] ** 2)
            + jnp.mean(d[:, 1] ** 2)
            + rg * jnp.mean(d[:, 2] ** 2))


if __name__ == "__main__":
    key = jax.random.PRNGKey(0)
    k1, k2, k3, k4 = jax.random.split(key, 4)

    block_width = 0.1
    block_length = 0.2

    # Small case (grid of 1, padded tail).
    B = 8
    pose_pred = jax.random.normal(k1, (B, 3), dtype=jnp.float32)
    pose_target = jax.random.normal(k2, (B, 3), dtype=jnp.float32)
    loss = jax.block_until_ready(
        se2_pose_loss(pose_pred, pose_target, block_width, block_length))
    ref = jax.block_until_ready(
        _reference(pose_pred, pose_target, block_width, block_length))
    assert jnp.allclose(loss, ref, rtol=1e-5, atol=1e-6), (loss, ref)

    # Slightly larger case that exercises the batch grid + accumulator path
    # (B*3 = 6144 elems -> 16 rows, row_tile=8 -> grid of 2, no padding).
    B2 = 2048
    pose_pred2 = jax.random.normal(k3, (B2, 3), dtype=jnp.float32)
    pose_target2 = jax.random.normal(k4, (B2, 3), dtype=jnp.float32)
    loss2 = jax.block_until_ready(
        se2_pose_loss(pose_pred2, pose_target2, block_width, block_length,
                      row_tile=8))
    ref2 = jax.block_until_ready(
        _reference(pose_pred2, pose_target2, block_width, block_length))
    assert jnp.allclose(loss2, ref2, rtol=1e-4, atol=1e-5), (loss2, ref2)

    print("KERNEL_OK")
</pallas_src>

<mosaic_0001>
module attributes {stable_mosaic.version = 11 : i64} {
  func.func @_se2_loss_kernel(%arg0: i32, %arg1: memref<8x384xf32, #tpu.memory_space<vmem>>, %arg2: memref<8x384xf32, #tpu.memory_space<vmem>>, %arg3: memref<1x384xf32, #tpu.memory_space<vmem>>, %arg4: memref<1x1xf32, #tpu.memory_space<smem>>, %arg5: memref<1x1xf32, #tpu.memory_space<smem>>) attributes {dimension_semantics = [#tpu.dimension_semantics<arbitrary>], iteration_bounds = array<i64: 1>, scalar_prefetch = 0 : i64, scratch_operands = 1 : i64, tpu.core_type = #tpu.core_type<tc>, window_params = [{transform_indices = @transform_0, window_bounds = array<i64: 8, 384>}, {transform_indices = @transform_1, window_bounds = array<i64: 8, 384>}, {pipeline_mode = #tpu.pipeline_mode<synchronous>, transform_indices = @transform_2, window_bounds = array<i64: 1, 384>}, {transform_indices = @transform_3, window_bounds = array<i64: 1, 1>}]} {
    %c0_i32 = arith.constant 0 : i32
    %0 = arith.cmpi eq, %arg0, %c0_i32 : i32
    %1 = arith.extui %0 : i1 to i32
    %c0_i32_0 = arith.constant 0 : i32
    %2 = arith.cmpi ne, %1, %c0_i32_0 : i32
    scf.if %2 {
      %cst_12 = arith.constant 0.000000e+00 : f32
      %c0_13 = arith.constant 0 : index
      %c0_14 = arith.constant 0 : index
      %20 = memref.load %arg5[%c0_13, %c0_14] : memref<1x1xf32, #tpu.memory_space<smem>>
      memref.store %cst_12, %arg5[%c0_13, %c0_14] : memref<1x1xf32, #tpu.memory_space<smem>>
    } else {
    }
    %c0 = arith.constant 0 : index
    %c0_1 = arith.constant 0 : index
    %3 = vector.load %arg1[%c0, %c0_1] : memref<8x384xf32, #tpu.memory_space<vmem>>, vector<8x384xf32>
    %c0_2 = arith.constant 0 : index
    %c0_3 = arith.constant 0 : index
    %4 = vector.load %arg2[%c0_2, %c0_3] : memref<8x384xf32, #tpu.memory_space<vmem>>, vector<8x384xf32>
    %5 = arith.subf %3, %4 : vector<8x384xf32>
    %c0_4 = arith.constant 0 : index
    %c0_5 = arith.constant 0 : index
    %6 = memref.load %arg5[%c0_4, %c0_5] : memref<1x1xf32, #tpu.memory_space<smem>>
    %7 = arith.mulf %5, %5 : vector<8x384xf32>
    %c0_6 = arith.constant 0 : index
    %c0_7 = arith.constant 0 : index
    %8 = vector.load %arg3[%c0_6, %c0_7] : memref<1x384xf32, #tpu.memory_space<vmem>>, vector<1x384xf32>
    %9 = vector.broadcast %8 : vector<1x384xf32> to vector<8x384xf32>
    %10 = arith.mulf %7, %9 : vector<8x384xf32>
    %11 = vector.shape_cast %10 : vector<8x384xf32> to vector<1x8x384xf32>
    %cst = arith.constant dense<0.000000e+00> : vector<1xf32>
    %12 = vector.multi_reduction <add>, %11, %cst [1, 2] : vector<1x8x384xf32> to vector<1xf32>
    %13 = vector.shape_cast %12 : vector<1xf32> to vector<1x1x1xf32>
    %14 = vector.extract %13[0, 0, 0] : f32 from vector<1x1x1xf32>
    %15 = arith.addf %6, %14 : f32
    %c0_8 = arith.constant 0 : index
    %c0_9 = arith.constant 0 : index
    %16 = memref.load %arg5[%c0_8, %c0_9] : memref<1x1xf32, #tpu.memory_space<smem>>
    memref.store %15, %arg5[%c0_8, %c0_9] : memref<1x1xf32, #tpu.memory_space<smem>>
    %c0_i32_10 = arith.constant 0 : i32
    %17 = arith.cmpi eq, %arg0, %c0_i32_10 : i32
    %18 = arith.extui %17 : i1 to i32
    %c0_i32_11 = arith.constant 0 : i32
    %19 = arith.cmpi ne, %18, %c0_i32_11 : i32
    scf.if %19 {
      %c0_12 = arith.constant 0 : index
      %c0_13 = arith.constant 0 : index
      %20 = memref.load %arg5[%c0_12, %c0_13] : memref<1x1xf32, #tpu.memory_space<smem>>
      %c0_14 = arith.constant 0 : index
      %c0_15 = arith.constant 0 : index
      %21 = memref.load %arg4[%c0_14, %c0_15] : memref<1x1xf32, #tpu.memory_space<smem>>
      memref.store %20, %arg4[%c0_14, %c0_15] : memref<1x1xf32, #tpu.memory_space<smem>>
    } else {
    }
    return
  }
  func.func @transform_0(%arg0: i32) -> (i32, i32) {
    %c0_i32 = arith.constant 0 : i32
    %c0_i32_0 = arith.constant 0 : i32
    return %arg0, %c0_i32 : i32, i32
  }
  func.func @transform_1(%arg0: i32) -> (i32, i32) {
    %c0_i32 = arith.constant 0 : i32
    %c0_i32_0 = arith.constant 0 : i32
    return %arg0, %c0_i32 : i32, i32
  }
  func.func @transform_2(%arg0: i32) -> (i32, i32) {
    %c0_i32 = arith.constant 0 : i32
    %c0_i32_0 = arith.constant 0 : i32
    %c0_i32_1 = arith.constant 0 : i32
    return %c0_i32, %c0_i32_0 : i32, i32
  }
  func.func @transform_3(%arg0: i32) -> (i32, i32) {
    %c0_i32 = arith.constant 0 : i32
    %c0_i32_0 = arith.constant 0 : i32
    %c0_i32_1 = arith.constant 0 : i32
    return %c0_i32, %c0_i32_0 : i32, i32
  }
}

</mosaic_0001>

<llo_original>
// kernel: tpu_custom_call.1
$region0: #{tpu_custom_call.1}
  #allocation0 [shape = 'u32[]', space=smem, size = 0x4, offset = 0x4, fixed_abs, tag = 'smem constant byte address 0x4 - core index']
  #allocation1 [shape = 'u32[144,128]{1,0:T(1,128)}', space=vmem, size = 0x12000, scoped, tag = 'internal scratch']
  #allocation2 [shape = 'f32[1,1]{1,0:T(1,128)}', space=smem, size = 0x200, scoped, tag = 'scratch operand']
  %s0 = inlined_call_operand.hbm [shape: f32[8,384], index: 0, kind: input, shape index: {}]
  %s1 = inlined_call_operand.hbm [shape: f32[8,384], index: 1, kind: input, shape index: {}]
  %s2 = inlined_call_operand.vmem [shape: f32[1,384], index: 2, kind: input, shape index: {}]
  %s3 = inlined_call_operand.hbm [shape: f32[1,1], index: 3, kind: output, shape index: {}]
  %s4 = sld [smem:[#allocation0]]
  $region38: #{tpu_custom_call.1} parent=0
    _
  %s6 = ssub.s32 1, %s4
  %s7 = scalar_select 0, %s6, %s4
  $region1: #{tpu_custom_call.1} parent=0
    #allocation3 [shape = 'u8[12288]{0}', space=vmem, size = 0x3000, scoped, tag = 'input window, operand 0, single buffered']
    #allocation4 [shape = 's32[1]{0}', space=sflag, size = 0x4, scoped, tag = 'scoped memory for tpu_custom_call.1']
    #allocation5 [shape = 's32[1]{0}', space=sflag, size = 0x4, scoped, tag = 'scoped memory for tpu_custom_call.1']
    #allocation6 [shape = 'u8[12288]{0}', space=vmem, size = 0x3000, scoped, tag = 'input window, operand 1, single buffered']
    #allocation7 [shape = 's32[1]{0}', space=sflag, size = 0x4, scoped, tag = 'scoped memory for tpu_custom_call.1']
    #allocation8 [shape = 'u8[512]{0}', space=smem, size = 0x200, scoped, tag = 'output window, operand 0, single buffered']
    %8 = vsyncpa [#allocation4], 0
    %9 = vsyncpa [#allocation7], 0
    %10 = vsyncpa [#allocation5], 0
    // Predicated region
    $region2: #{tpu_custom_call.1} parent=1 // pred_check
      _
    $region3: #{tpu_custom_call.1} parent=1 // pred_check_branch
      %12 = sbr.rel (0) target = $region5
    $region4: #{tpu_custom_call.1} parent=1 // pred_region
      %s14 = ssub.s32 384, 384
      %15 = vsyncadd [#allocation4], %s14
      %s17 = sshll.u32 [#allocation3], 4
      %s18 = int_to_ptr.vmem [resolvable:$true] %s17
      %20 = dma.hbm_to_vmem [thread:$0]  %s0, 384, %s18, [#allocation4]
    $region5: #{tpu_custom_call.1} parent=1 // pred_fallthru
      _
    // Predicated region
    $region6: #{tpu_custom_call.1} parent=1 // pred_check
      _
    $region7: #{tpu_custom_call.1} parent=1 // pred_check_branch
      %22 = sbr.rel (0) target = $region9
    $region8: #{tpu_custom_call.1} parent=1 // pred_region
      %s24 = ssub.s32 384, 384
      %25 = vsyncadd [#allocation7], %s24
      %s27 = sshll.u32 [#allocation6], 4
      %s28 = int_to_ptr.vmem [resolvable:$true] %s27
      %30 = dma.hbm_to_vmem [thread:$0]  %s1, 384, %s28, [#allocation7]
    $region9: #{tpu_custom_call.1} parent=1 // pred_fallthru
      _
    // Predicated region
    $region10: #{tpu_custom_call.1} parent=1 // pred_check
      _
    $region11: #{tpu_custom_call.1} parent=1 // pred_check_branch
      %32 = sbr.rel (0) target = $region13
    $region12: #{tpu_custom_call.1} parent=1 // pred_region
      _
    $region13: #{tpu_custom_call.1} parent=1 // pred_fallthru
      _
    // Predicated region
    $region14: #{tpu_custom_call.1} parent=1 // pred_check
      _
    $region15: #{tpu_custom_call.1} parent=1 // pred_check_branch
      %34 = sbr.rel (0) target = $region17
    $region16: #{tpu_custom_call.1} parent=1 // pred_region
      %35 = dma.done [#allocation4], 384
    $region17: #{tpu_custom_call.1} parent=1 // pred_fallthru
      _
    // Predicated region
    $region18: #{tpu_custom_call.1} parent=1 // pred_check
      _
    $region19: #{tpu_custom_call.1} parent=1 // pred_check_branch
      %37 = sbr.rel (0) target = $region21
    $region20: #{tpu_custom_call.1} parent=1 // pred_region
      %38 = dma.done [#allocation7], 384
    $region21: #{tpu_custom_call.1} parent=1 // pred_fallthru
      _
    %p39 = scmp.eq.s32.totalorder 0, 0
    // Predicated region
    $region22: #{tpu_custom_call.1} parent=1 // pred_check
      %p40 = pneg %p39
    $region23: #{tpu_custom_call.1} parent=1 // pred_check_branch
      %42 = sbr.rel (%p40) target = $region25
    $region24: #{tpu_custom_call.1} parent=1 // pred_region
      %s43 = scalar_lea.smem [#allocation2], 0
      %44 = sst [smem:[%s43]] 0.0
    $region25: #{tpu_custom_call.1} parent=1 // pred_fallthru
      _
    %v45 = vld [vmem:[#allocation3] sm:$0xff]
    %v46 = vld [vmem:[#allocation3 + $0x8] sm:$0xff]
    %v47 = vld [vmem:[#allocation3 + $0x10] sm:$0xff]
    %v48 = vld [vmem:[#allocation6] sm:$0xff]
    %v49 = vld [vmem:[#allocation6 + $0x8] sm:$0xff]
    %v50 = vld [vmem:[#allocation6 + $0x10] sm:$0xff]
    %v51 = vsub.f32 %v45, %v48
    %v52 = vsub.f32 %v46, %v49
    %v53 = vsub.f32 %v47, %v50
    %s54 = sld [smem:[#allocation2]]
    %v55 = vmul.f32 %v51, %v51
    %v56 = vmul.f32 %v52, %v52
    %v57 = vmul.f32 %v53, %v53
    %v58 = vld [vmem:[%s2] sm:$0x7]
    %v60 = vlaneseq
    %v61 = vshrl.u32 %v60, 7
    %v62 = vsub.s32 0, %v61
    %v63 = vrot.slane %v58, %v62
    %v64 = vlaneseq
    %v65 = vshrl.u32 %v64, 7
    %v66 = vsub.s32 1, %v65
    %v67 = vrot.slane %v58, %v66
    %v68 = vlaneseq
    %v69 = vshrl.u32 %v68, 7
    %v70 = vsub.s32 2, %v69
    %v71 = vrot.slane %v58, %v70
    %v75 = vmul.f32 %v55, %v63
    %v76 = vmul.f32 %v56, %v67
    %v77 = vmul.f32 %v57, %v71
    %v78 = vadd.f32 %v75, %v76
    %v79 = vadd.f32 %v78, %v77
    %80 = vadd.xlane.f32.xlu0 %v79
    %v81 = vpop.xlane.xlu0 %80
    %v82 = vrot.slane %v81, 4
    %v83 = vadd.f32 %v81, %v82
    %v84 = vrot.slane %v83, 2
    %v85 = vadd.f32 %v83, %v84
    %v86 = vrot.slane %v85, 1
    %v87 = vadd.f32 %v85, %v86
    %s88 = vtos %v87
    %s89 = sadd.f32 %s54, %s88
    %s90 = scalar_lea.smem [#allocation2], 0
    %91 = sst [smem:[%s90]] %s89
    // Predicated region
    $region26: #{tpu_custom_call.1} parent=1 // pred_check
      %p92 = pneg %p39
    $region27: #{tpu_custom_call.1} parent=1 // pred_check_branch
      %94 = sbr.rel (%p92) target = $region29
    $region28: #{tpu_custom_call.1} parent=1 // pred_region
      %s95 = sld [smem:[#allocation2]]
      %s96 = scalar_lea.smem [#allocation8], 0
      %97 = sst [smem:[%s96]] %s95
    $region29: #{tpu_custom_call.1} parent=1 // pred_fallthru
      _
    // Predicated region
    $region30: #{tpu_custom_call.1} parent=1 // pred_check
      _
    $region31: #{tpu_custom_call.1} parent=1 // pred_check_branch
      %99 = sbr.rel (0) target = $region33
    $region32: #{tpu_custom_call.1} parent=1 // pred_region
      %s101 = ssub.s32 16, 16
      %102 = vsyncadd [#allocation5], %s101
      %105 = dma.smem_to_hbm [#allocation8], 16, %s3, [#allocation5]
    $region33: #{tpu_custom_call.1} parent=1 // pred_fallthru
      _
    // Predicated region
    $region34: #{tpu_custom_call.1} parent=1 // pred_check
      _
    $region35: #{tpu_custom_call.1} parent=1 // pred_check_branch
      %107 = sbr.rel (0) target = $region37
    $region36: #{tpu_custom_call.1} parent=1 // pred_region
      %108 = dma.done [#allocation5], 16
    $region37: #{tpu_custom_call.1} parent=1 // pred_fallthru
      _
    %109 = sfence
    %110 = vsyncpa [#allocation4], 1
    %111 = vsyncpa [#allocation7], 1
    %112 = vsyncpa [#allocation5], 1

</llo_original>
